<compile_context>
chip_gen: v6e
topology: v6e:2x2x1
jax: 0.10.0
libtpu: 0.0.40
codegen_flags: <defaults>
</compile_context>

<pallas_src>
import functools
import math

import jax
import jax.numpy as jnp
from jax.experimental import pallas as pl
from jax.experimental.pallas import tpu as pltpu


def _round_up(x, m):
    return (x + m - 1) // m * m


def _ensemble_kernel(x_ref, w_ref, b_ref, o_ref, *, n_models, c_pad, log_m,
                     log_floor):
    # x_ref: [TB, D] (matmul dtype), w_ref: [D, M*Cp] (matmul dtype),
    # b_ref: [1, M*Cp] f32, o_ref: [TB, Cp] f32.
    # One fused MXU pass over all models' classes (lane-dense N = M*Cp).
    logits = jnp.dot(x_ref[...], w_ref[...], preferred_element_type=jnp.float32)
    logits = logits + b_ref[...]  # f32 bias; pad classes carry -1e30

    # Per-model log_softmax over lane-tile-aligned (multiple-of-128) slices.
    # M is tiny and static -> unrolled Python loop, whole-vreg slices.
    lps = []
    for m in range(n_models):
        z = logits[:, m * c_pad:(m + 1) * c_pad]
        z = z - jnp.max(z, axis=-1, keepdims=True)
        lse = jnp.log(jnp.sum(jnp.exp(z), axis=-1, keepdims=True))
        lps.append(z - lse)

    # log(mean_m p_m) = logsumexp_m(log p_m) - log M, entirely in log space so
    # tiny probabilities never underflow (TPU flushes f32 subnormals to zero).
    run_max = lps[0]
    for lp in lps[1:]:
        run_max = jnp.maximum(run_max, lp)
    s = jnp.zeros_like(run_max)
    for lp in lps:
        s = s + jnp.exp(lp - run_max)
    out = run_max + jnp.log(s) - jnp.float32(log_m)

    # torch.clamp(p, min=1e-40) followed by log == clamping the log-prob at
    # log(1e-40); done on the log side to avoid the subnormal-flush no-op.
    out = jnp.maximum(out, jnp.float32(log_floor))
    o_ref[...] = out.astype(o_ref.dtype)


def _single_kernel(x_ref, w_ref, b_ref, o_ref):
    # Single model: plain logits, no softmax/log.
    o_ref[...] = (
        jnp.dot(x_ref[...], w_ref[...], preferred_element_type=jnp.float32)
        + b_ref[...]
    ).astype(o_ref.dtype)


def pack_ensemble_params(weights, biases, *, matmul_dtype=jnp.bfloat16):
    """Pack [M, D, C] weights / [M, C] biases into kernel operands.

    Call ONCE and reuse across forward calls — this hoists the HBM rewrite of
    all weight bytes out of the per-call hot path.
    """
    M, D, C = weights.shape
    Cp = _round_up(C, 128)                                        # lane-dense classes
    w_pad = jnp.pad(weights, ((0, 0), (0, 0), (0, Cp - C)))       # [M, D, Cp]
    wp = jnp.transpose(w_pad, (1, 0, 2)).reshape(D, M * Cp)       # [D, M*Cp]
    wp = wp.astype(matmul_dtype)
    # Bias stays f32 and is added AFTER the matmul; the -1e30 pad sentinel that
    # removes padded classes from each softmax must never be folded into the
    # (possibly bf16) matmul operand.
    pad_val = -1e30 if M > 1 else 0.0
    bp = jnp.pad(biases.astype(jnp.float32), ((0, 0), (0, Cp - C)),
                 constant_values=pad_val).reshape(1, M * Cp)
    return wp, bp, (M, C, Cp)


def ensemble_forward_packed(x, wp, bp, meta):
    """x: [B, D]; wp/bp from pack_ensemble_params  ->  [B, C] float32."""
    M, C, Cp = meta
    B, D = x.shape
    N = M * Cp
    assert wp.shape == (D, N) and bp.shape == (1, N)

    matmul_dtype = wp.dtype
    itemsize = jnp.dtype(matmul_dtype).itemsize
    row_align = 8 * max(1, 4 // itemsize)   # 8 rows/sublane-group f32, 16 bf16

    # Batch tiling: >= 2 grid steps whenever B > row_align so the "parallel"
    # axis can shard rows over v7x's two TensorCores (no-op on v5e/v6e).
    if B <= row_align:
        TB = row_align
    else:
        TB = min(256, _round_up((B + 1) // 2, row_align))
    Bp = _round_up(B, TB)

    xp = x if Bp == B else jnp.pad(x, ((0, Bp - B), (0, 0)))
    xp = xp.astype(matmul_dtype)

    grid = (Bp // TB,)

    # Explicit VMEM budget once operands outgrow the 16 MiB scoped default
    # (v5e); capped at v7x's 64 MiB physical VMEM.
    est = (2 * D * N * itemsize            # worst case: double-buffered W
           + 2 * TB * D * itemsize         # x tiles
           + 2 * N * 4                     # bias
           + 2 * TB * Cp * 4               # output tiles
           + 3 * TB * N * 4                # logits + log-prob temporaries
           + (2 << 20))                    # slack
    vmem_limit = min(est, 64 << 20) if est > (16 << 20) else None

    cparams = pltpu.CompilerParams(
        dimension_semantics=("parallel",), vmem_limit_bytes=vmem_limit)

    if M == 1:
        kernel = _single_kernel
    else:
        kernel = functools.partial(
            _ensemble_kernel, n_models=M, c_pad=Cp,
            log_m=math.log(M), log_floor=math.log(1e-40))

    def build(single_buffer_weights):
        # W and b are grid-invariant (index_map constant): a single VMEM buffer
        # suffices, halving the dominant VMEM footprint.
        w_kwargs = (
            {"pipeline_mode": pl.Buffered(1)} if single_buffer_weights else {})
        in_specs = [
            pl.BlockSpec((TB, D), lambda i: (i, 0)),             # x batch tile
            pl.BlockSpec((D, N), lambda i: (0, 0), **w_kwargs),  # packed W
            pl.BlockSpec((1, N), lambda i: (0, 0), **w_kwargs),  # packed b
        ]
        out_specs = pl.BlockSpec((TB, Cp), lambda i: (i, 0))     # lane-dense out
        return pl.pallas_call(
            kernel,
            out_shape=jax.ShapeDtypeStruct((Bp, Cp), jnp.float32),
            grid=grid,
            in_specs=in_specs,
            out_specs=out_specs,
            compiler_params=cparams,
        )

    try:
        out_padded = build(True)(xp, wp, bp)
    except Exception:
        # pipeline_mode=pl.Buffered(1) not supported on this jax build; fall
        # back to default double-buffering (correctness unaffected).
        out_padded = build(False)(xp, wp, bp)

    return out_padded[:B, :C]


def ensemble_forward(x, weights, biases, *, matmul_dtype=jnp.bfloat16):
    """One-shot convenience wrapper.  For repeated calls, pack once with
    pack_ensemble_params() and call ensemble_forward_packed()."""
    wp, bp, meta = pack_ensemble_params(weights, biases,
                                        matmul_dtype=matmul_dtype)
    return ensemble_forward_packed(x, wp, bp, meta)


def ensemble_reference(x, weights, biases):
    """Pure-JAX reference matching the PyTorch Ensemble semantics."""
    M = weights.shape[0]
    if M == 1:
        return x @ weights[0] + biases[0]
    acc = 0.0
    for m in range(M):
        logits = x @ weights[m] + biases[m]
        acc = acc + jax.nn.softmax(logits, axis=-1)
    out = acc / M
    out = jnp.maximum(out, 1e-40)
    return jnp.log(out)


if __name__ == "__main__":
    key = jax.random.PRNGKey(0)
    B, D, C, M = 8, 32, 16, 3   # batch, features, classes, number of submodels

    kx, kw, kb = jax.random.split(key, 3)
    x = jax.random.normal(kx, (B, D), dtype=jnp.float32)
    weights = jax.random.normal(kw, (M, D, C), dtype=jnp.float32) * 0.1
    biases = jax.random.normal(kb, (M, C), dtype=jnp.float32) * 0.01

    ref = ensemble_reference(x, weights, biases)

    # --- strict f32 parity check (mixture branch) ----------------------------
    out_f32 = jax.block_until_ready(
        ensemble_forward(x, weights, biases, matmul_dtype=jnp.float32))
    assert out_f32.shape == (B, C)
    assert jnp.allclose(out_f32, ref, atol=1e-5, rtol=1e-5), (
        f"f32 max abs err = {jnp.max(jnp.abs(out_f32 - ref))}")

    # --- production path: pack once, bf16 matmul, reuse packed operands ------
    wp, bp, meta = pack_ensemble_params(weights, biases,
                                        matmul_dtype=jnp.bfloat16)
    out_bf16 = jax.block_until_ready(ensemble_forward_packed(x, wp, bp, meta))
    assert out_bf16.shape == (B, C)
    assert jnp.allclose(out_bf16, ref, atol=5e-2, rtol=5e-2), (
        f"bf16 max abs err = {jnp.max(jnp.abs(out_bf16 - ref))}")

    # --- single-model branch (plain logits) -----------------------------------
    ref1 = ensemble_reference(x, weights[:1], biases[:1])
    out1 = jax.block_until_ready(
        ensemble_forward(x, weights[:1], biases[:1], matmul_dtype=jnp.float32))
    assert out1.shape == (B, C)
    assert jnp.allclose(out1, ref1, atol=1e-5, rtol=1e-5), (
        f"single-model max abs err = {jnp.max(jnp.abs(out1 - ref1))}")

    print("KERNEL_OK")
</pallas_src>

<mosaic_0001>
module attributes {stable_mosaic.version = 11 : i64} {
  func.func @_ensemble_kernel(%arg0: i32, %arg1: memref<8x32xf32, #tpu.memory_space<vmem>>, %arg2: memref<32x384xf32, #tpu.memory_space<vmem>>, %arg3: memref<1x384xf32, #tpu.memory_space<vmem>>, %arg4: memref<8x128xf32, #tpu.memory_space<vmem>>) attributes {dimension_semantics = [#tpu.dimension_semantics<parallel>], iteration_bounds = array<i64: 1>, scalar_prefetch = 0 : i64, scratch_operands = 0 : i64, tpu.core_type = #tpu.core_type<tc>, window_params = [{transform_indices = @transform_0, window_bounds = array<i64: 8, 32>}, {pipeline_mode = #tpu.pipeline_mode<synchronous>, transform_indices = @transform_1, window_bounds = array<i64: 32, 384>}, {pipeline_mode = #tpu.pipeline_mode<synchronous>, transform_indices = @transform_2, window_bounds = array<i64: 1, 384>}, {transform_indices = @transform_3, window_bounds = array<i64: 8, 128>}]} {
    %c0 = arith.constant 0 : index
    %c0_0 = arith.constant 0 : index
    %0 = vector.load %arg1[%c0, %c0_0] : memref<8x32xf32, #tpu.memory_space<vmem>>, vector<8x32xf32>
    %c0_1 = arith.constant 0 : index
    %c0_2 = arith.constant 0 : index
    %1 = vector.load %arg2[%c0_1, %c0_2] : memref<32x384xf32, #tpu.memory_space<vmem>>, vector<32x384xf32>
    %cst = arith.constant dense<0.000000e+00> : vector<8x384xf32>
    %2 = tpu.matmul %0, %1, %cst {dimension_numbers = #tpu.dot_dimension_numbers<[1], [0], [0], [1], [0, 0, 1, 1], [], []>} : vector<8x32xf32>, vector<32x384xf32>, vector<8x384xf32> -> vector<8x384xf32>
    %c0_3 = arith.constant 0 : index
    %c0_4 = arith.constant 0 : index
    %3 = vector.load %arg3[%c0_3, %c0_4] : memref<1x384xf32, #tpu.memory_space<vmem>>, vector<1x384xf32>
    %4 = vector.broadcast %3 : vector<1x384xf32> to vector<8x384xf32>
    %5 = arith.addf %2, %4 : vector<8x384xf32>
    %6 = vector.extract_strided_slice %5 {offsets = [0, 0], sizes = [8, 128], strides = [1, 1]} : vector<8x384xf32> to vector<8x128xf32>
    %cst_5 = arith.constant dense<0xFF800000> : vector<8xf32>
    %7 = vector.multi_reduction <maximumf>, %6, %cst_5 [1] : vector<8x128xf32> to vector<8xf32>
    %8 = vector.shape_cast %7 : vector<8xf32> to vector<8x1xf32>
    %9 = vector.broadcast %8 : vector<8x1xf32> to vector<8x128xf32>
    %10 = arith.subf %6, %9 : vector<8x128xf32>
    %11 = math.exp %10 : vector<8x128xf32>
    %cst_6 = arith.constant dense<0.000000e+00> : vector<8xf32>
    %12 = vector.multi_reduction <add>, %11, %cst_6 [1] : vector<8x128xf32> to vector<8xf32>
    %13 = vector.shape_cast %12 : vector<8xf32> to vector<8x1xf32>
    %14 = math.log %13 : vector<8x1xf32>
    %15 = vector.broadcast %14 : vector<8x1xf32> to vector<8x128xf32>
    %16 = arith.subf %10, %15 : vector<8x128xf32>
    %17 = vector.extract_strided_slice %5 {offsets = [0, 128], sizes = [8, 128], strides = [1, 1]} : vector<8x384xf32> to vector<8x128xf32>
    %cst_7 = arith.constant dense<0xFF800000> : vector<8xf32>
    %18 = vector.multi_reduction <maximumf>, %17, %cst_7 [1] : vector<8x128xf32> to vector<8xf32>
    %19 = vector.shape_cast %18 : vector<8xf32> to vector<8x1xf32>
    %20 = vector.broadcast %19 : vector<8x1xf32> to vector<8x128xf32>
    %21 = arith.subf %17, %20 : vector<8x128xf32>
    %22 = math.exp %21 : vector<8x128xf32>
    %cst_8 = arith.constant dense<0.000000e+00> : vector<8xf32>
    %23 = vector.multi_reduction <add>, %22, %cst_8 [1] : vector<8x128xf32> to vector<8xf32>
    %24 = vector.shape_cast %23 : vector<8xf32> to vector<8x1xf32>
    %25 = math.log %24 : vector<8x1xf32>
    %26 = vector.broadcast %25 : vector<8x1xf32> to vector<8x128xf32>
    %27 = arith.subf %21, %26 : vector<8x128xf32>
    %28 = vector.extract_strided_slice %5 {offsets = [0, 256], sizes = [8, 128], strides = [1, 1]} : vector<8x384xf32> to vector<8x128xf32>
    %cst_9 = arith.constant dense<0xFF800000> : vector<8xf32>
    %29 = vector.multi_reduction <maximumf>, %28, %cst_9 [1] : vector<8x128xf32> to vector<8xf32>
    %30 = vector.shape_cast %29 : vector<8xf32> to vector<8x1xf32>
    %31 = vector.broadcast %30 : vector<8x1xf32> to vector<8x128xf32>
    %32 = arith.subf %28, %31 : vector<8x128xf32>
    %33 = math.exp %32 : vector<8x128xf32>
    %cst_10 = arith.constant dense<0.000000e+00> : vector<8xf32>
    %34 = vector.multi_reduction <add>, %33, %cst_10 [1] : vector<8x128xf32> to vector<8xf32>
    %35 = vector.shape_cast %34 : vector<8xf32> to vector<8x1xf32>
    %36 = math.log %35 : vector<8x1xf32>
    %37 = vector.broadcast %36 : vector<8x1xf32> to vector<8x128xf32>
    %38 = arith.subf %32, %37 : vector<8x128xf32>
    %39 = arith.maximumf %16, %27 : vector<8x128xf32>
    %40 = arith.maximumf %39, %38 : vector<8x128xf32>
    %cst_11 = arith.constant 0.000000e+00 : f32
    %41 = vector.broadcast %cst_11 : f32 to vector<8x128xf32>
    %42 = arith.subf %16, %40 : vector<8x128xf32>
    %43 = math.exp %42 : vector<8x128xf32>
    %44 = arith.addf %41, %43 : vector<8x128xf32>
    %45 = arith.subf %27, %40 : vector<8x128xf32>
    %46 = math.exp %45 : vector<8x128xf32>
    %47 = arith.addf %44, %46 : vector<8x128xf32>
    %48 = arith.subf %38, %40 : vector<8x128xf32>
    %49 = math.exp %48 : vector<8x128xf32>
    %50 = arith.addf %47, %49 : vector<8x128xf32>
    %51 = math.log %50 : vector<8x128xf32>
    %52 = arith.addf %40, %51 : vector<8x128xf32>
    %cst_12 = arith.constant 1.09861231 : f32
    %53 = vector.broadcast %cst_12 : f32 to vector<8x128xf32>
    %54 = arith.subf %52, %53 : vector<8x128xf32>
    %cst_13 = arith.constant -9.210340e+01 : f32
    %55 = vector.broadcast %cst_13 : f32 to vector<8x128xf32>
    %56 = arith.maximumf %54, %55 : vector<8x128xf32>
    %c0_14 = arith.constant 0 : index
    %c0_15 = arith.constant 0 : index
    %57 = vector.load %arg4[%c0_14, %c0_15] : memref<8x128xf32, #tpu.memory_space<vmem>>, vector<8x128xf32>
    tpu.vector_store %arg4[%c0_14, %c0_15], %56 {strides = array<i32>} : memref<8x128xf32, #tpu.memory_space<vmem>>, vector<8x128xf32>,
    return
  }
  func.func @transform_0(%arg0: i32) -> (i32, i32) {
    %c0_i32 = arith.constant 0 : i32
    %c0_i32_0 = arith.constant 0 : i32
    return %arg0, %c0_i32 : i32, i32
  }
  func.func @transform_1(%arg0: i32) -> (i32, i32) {
    %c0_i32 = arith.constant 0 : i32
    %c0_i32_0 = arith.constant 0 : i32
    %c0_i32_1 = arith.constant 0 : i32
    return %c0_i32, %c0_i32_0 : i32, i32
  }
  func.func @transform_2(%arg0: i32) -> (i32, i32) {
    %c0_i32 = arith.constant 0 : i32
    %c0_i32_0 = arith.constant 0 : i32
    %c0_i32_1 = arith.constant 0 : i32
    return %c0_i32, %c0_i32_0 : i32, i32
  }
  func.func @transform_3(%arg0: i32) -> (i32, i32) {
    %c0_i32 = arith.constant 0 : i32
    %c0_i32_0 = arith.constant 0 : i32
    return %arg0, %c0_i32 : i32, i32
  }
}

module attributes {stable_mosaic.version = 11 : i64} {
  func.func @_ensemble_kernel(%arg0: i32, %arg1: memref<8x32xf32, #tpu.memory_space<vmem>>, %arg2: memref<32x384xf32, #tpu.memory_space<vmem>>, %arg3: memref<1x384xf32, #tpu.memory_space<vmem>>, %arg4: memref<8x128xf32, #tpu.memory_space<vmem>>) attributes {dimension_semantics = [#tpu.dimension_semantics<parallel>], iteration_bounds = array<i64: 1>, scalar_prefetch = 0 : i64, scratch_operands = 0 : i64, tpu.core_type = #tpu.core_type<tc>, window_params = [{transform_indices = @transform_0, window_bounds = array<i64: 8, 32>}, {pipeline_mode = #tpu.pipeline_mode<synchronous>, transform_indices = @transform_1, window_bounds = array<i64: 32, 384>}, {pipeline_mode = #tpu.pipeline_mode<synchronous>, transform_indices = @transform_2, window_bounds = array<i64: 1, 384>}, {transform_indices = @transform_3, window_bounds = array<i64: 8, 128>}]} {
    %c0 = arith.constant 0 : index
    %c0_0 = arith.constant 0 : index
    %0 = vector.load %arg1[%c0, %c0_0] : memref<8x32xf32, #tpu.memory_space<vmem>>, vector<8x32xf32>
    %c0_1 = arith.constant 0 : index
    %c0_2 = arith.constant 0 : index
    %1 = vector.load %arg2[%c0_1, %c0_2] : memref<32x384xf32, #tpu.memory_space<vmem>>, vector<32x384xf32>
    %cst = arith.constant dense<0.000000e+00> : vector<8x384xf32>
    %2 = tpu.matmul %0, %1, %cst {dimension_numbers = #tpu.dot_dimension_numbers<[1], [0], [0], [1], [0, 0, 1, 1], [], []>} : vector<8x32xf32>, vector<32x384xf32>, vector<8x384xf32> -> vector<8x384xf32>
    %c0_3 = arith.constant 0 : index
    %c0_4 = arith.constant 0 : index
    %3 = vector.load %arg3[%c0_3, %c0_4] : memref<1x384xf32, #tpu.memory_space<vmem>>, vector<1x384xf32>
    %4 = vector.broadcast %3 : vector<1x384xf32> to vector<8x384xf32>
    %5 = arith.addf %2, %4 : vector<8x384xf32>
    %6 = vector.extract_strided_slice %5 {offsets = [0, 0], sizes = [8, 128], strides = [1, 1]} : vector<8x384xf32> to vector<8x128xf32>
    %cst_5 = arith.constant dense<0xFF800000> : vector<8xf32>
    %7 = vector.multi_reduction <maximumf>, %6, %cst_5 [1] : vector<8x128xf32> to vector<8xf32>
    %8 = vector.shape_cast %7 : vector<8xf32> to vector<8x1xf32>
    %9 = vector.broadcast %8 : vector<8x1xf32> to vector<8x128xf32>
    %10 = arith.subf %6, %9 : vector<8x128xf32>
    %11 = math.exp %10 : vector<8x128xf32>
    %cst_6 = arith.constant dense<0.000000e+00> : vector<8xf32>
    %12 = vector.multi_reduction <add>, %11, %cst_6 [1] : vector<8x128xf32> to vector<8xf32>
    %13 = vector.shape_cast %12 : vector<8xf32> to vector<8x1xf32>
    %14 = math.log %13 : vector<8x1xf32>
    %15 = vector.broadcast %14 : vector<8x1xf32> to vector<8x128xf32>
    %16 = arith.subf %10, %15 : vector<8x128xf32>
    %17 = vector.extract_strided_slice %5 {offsets = [0, 128], sizes = [8, 128], strides = [1, 1]} : vector<8x384xf32> to vector<8x128xf32>
    %cst_7 = arith.constant dense<0xFF800000> : vector<8xf32>
    %18 = vector.multi_reduction <maximumf>, %17, %cst_7 [1] : vector<8x128xf32> to vector<8xf32>
    %19 = vector.shape_cast %18 : vector<8xf32> to vector<8x1xf32>
    %20 = vector.broadcast %19 : vector<8x1xf32> to vector<8x128xf32>
    %21 = arith.subf %17, %20 : vector<8x128xf32>
    %22 = math.exp %21 : vector<8x128xf32>
    %cst_8 = arith.constant dense<0.000000e+00> : vector<8xf32>
    %23 = vector.multi_reduction <add>, %22, %cst_8 [1] : vector<8x128xf32> to vector<8xf32>
    %24 = vector.shape_cast %23 : vector<8xf32> to vector<8x1xf32>
    %25 = math.log %24 : vector<8x1xf32>
    %26 = vector.broadcast %25 : vector<8x1xf32> to vector<8x128xf32>
    %27 = arith.subf %21, %26 : vector<8x128xf32>
    %28 = vector.extract_strided_slice %5 {offsets = [0, 256], sizes = [8, 128], strides = [1, 1]} : vector<8x384xf32> to vector<8x128xf32>
    %cst_9 = arith.constant dense<0xFF800000> : vector<8xf32>
    %29 = vector.multi_reduction <maximumf>, %28, %cst_9 [1] : vector<8x128xf32> to vector<8xf32>
    %30 = vector.shape_cast %29 : vector<8xf32> to vector<8x1xf32>
    %31 = vector.broadcast %30 : vector<8x1xf32> to vector<8x128xf32>
    %32 = arith.subf %28, %31 : vector<8x128xf32>
    %33 = math.exp %32 : vector<8x128xf32>
    %cst_10 = arith.constant dense<0.000000e+00> : vector<8xf32>
    %34 = vector.multi_reduction <add>, %33, %cst_10 [1] : vector<8x128xf32> to vector<8xf32>
    %35 = vector.shape_cast %34 : vector<8xf32> to vector<8x1xf32>
    %36 = math.log %35 : vector<8x1xf32>
    %37 = vector.broadcast %36 : vector<8x1xf32> to vector<8x128xf32>
    %38 = arith.subf %32, %37 : vector<8x128xf32>
    %39 = arith.maximumf %16, %27 : vector<8x128xf32>
    %40 = arith.maximumf %39, %38 : vector<8x128xf32>
    %cst_11 = arith.constant 0.000000e+00 : f32
    %41 = vector.broadcast %cst_11 : f32 to vector<8x128xf32>
    %42 = arith.subf %16, %40 : vector<8x128xf32>
    %43 = math.exp %42 : vector<8x128xf32>
    %44 = arith.addf %41, %43 : vector<8x128xf32>
    %45 = arith.subf %27, %40 : vector<8x128xf32>
    %46 = math.exp %45 : vector<8x128xf32>
    %47 = arith.addf %44, %46 : vector<8x128xf32>
    %48 = arith.subf %38, %40 : vector<8x128xf32>
    %49 = math.exp %48 : vector<8x128xf32>
    %50 = arith.addf %47, %49 : vector<8x128xf32>
    %51 = math.log %50 : vector<8x128xf32>
    %52 = arith.addf %40, %51 : vector<8x128xf32>
    %cst_12 = arith.constant 1.09861231 : f32
    %53 = vector.broadcast %cst_12 : f32 to vector<8x128xf32>
    %54 = arith.subf %52, %53 : vector<8x128xf32>
    %cst_13 = arith.constant -9.210340e+01 : f32
    %55 = vector.broadcast %cst_13 : f32 to vector<8x128xf32>
    %56 = arith.maximumf %54, %55 : vector<8x128xf32>
    %c0_14 = arith.constant 0 : index
    %c0_15 = arith.constant 0 : index
    %57 = vector.load %arg4[%c0_14, %c0_15] : memref<8x128xf32, #tpu.memory_space<vmem>>, vector<8x128xf32>
    tpu.vector_store %arg4[%c0_14, %c0_15], %56 {strides = array<i32>} : memref<8x128xf32, #tpu.memory_space<vmem>>, vector<8x128xf32>,
    return
  }
  func.func @transform_0(%arg0: i32) -> (i32, i32) {
    %c0_i32 = arith.constant 0 : i32
    %c0_i32_0 = arith.constant 0 : i32
    return %arg0, %c0_i32 : i32, i32
  }
  func.func @transform_1(%arg0: i32) -> (i32, i32) {
    %c0_i32 = arith.constant 0 : i32
    %c0_i32_0 = arith.constant 0 : i32
    %c0_i32_1 = arith.constant 0 : i32
    return %c0_i32, %c0_i32_0 : i32, i32
  }
  func.func @transform_2(%arg0: i32) -> (i32, i32) {
    %c0_i32 = arith.constant 0 : i32
    %c0_i32_0 = arith.constant 0 : i32
    %c0_i32_1 = arith.constant 0 : i32
    return %c0_i32, %c0_i32_0 : i32, i32
  }
  func.func @transform_3(%arg0: i32) -> (i32, i32) {
    %c0_i32 = arith.constant 0 : i32
    %c0_i32_0 = arith.constant 0 : i32
    return %arg0, %c0_i32 : i32, i32
  }
}

</mosaic_0001>

<llo_original>
// kernel: tpu_custom_call.1
$region0: #{tpu_custom_call.1}
  #allocation0 [shape = 'u32[]', space=smem, size = 0x4, offset = 0x4, fixed_abs, tag = 'smem constant byte address 0x4 - core index']
  #allocation1 [shape = 'u32[144,128]{1,0:T(1,128)}', space=vmem, size = 0x12000, scoped, tag = 'internal scratch']
  %s0 = inlined_call_operand.hbm [shape: f32[8,32], index: 0, kind: input, shape index: {}]
  %s1 = inlined_call_operand.hbm [shape: f32[32,384], index: 1, kind: input, shape index: {}]
  %s2 = inlined_call_operand.vmem [shape: f32[1,384], index: 2, kind: input, shape index: {}]
  %s3 = inlined_call_operand.hbm [shape: f32[8,128], index: 3, kind: output, shape index: {}]
  %s4 = sld [smem:[#allocation0]]
  $region30: #{tpu_custom_call.1} parent=0
    _
  %s6 = ssub.s32 1, %s4
  %s7 = scalar_select 0, %s6, %s4
  $region1: #{tpu_custom_call.1} parent=0
    #allocation2 [shape = 'u8[4096]{0}', space=vmem, size = 0x1000, scoped, tag = 'input window, operand 0, single buffered']
    #allocation3 [shape = 's32[1]{0}', space=sflag, size = 0x4, scoped, tag = 'scoped memory for tpu_custom_call.1']
    #allocation4 [shape = 's32[1]{0}', space=sflag, size = 0x4, scoped, tag = 'scoped memory for tpu_custom_call.1']
    #allocation5 [shape = 'u8[49152]{0}', space=vmem, size = 0xc000, scoped, tag = 'input window, operand 1, single buffered']
    #allocation6 [shape = 's32[1]{0}', space=sflag, size = 0x4, scoped, tag = 'scoped memory for tpu_custom_call.1']
    #allocation7 [shape = 'u8[4096]{0}', space=vmem, size = 0x1000, scoped, tag = 'output window, operand 0, single buffered']
    %8 = vsyncpa [#allocation3], 0
    %9 = vsyncpa [#allocation6], 0
    %10 = vsyncpa [#allocation4], 0
    // Predicated region
    $region2: #{tpu_custom_call.1} parent=1 // pred_check
      _
    $region3: #{tpu_custom_call.1} parent=1 // pred_check_branch
      %12 = sbr.rel (0) target = $region5
    $region4: #{tpu_custom_call.1} parent=1 // pred_region
      %s14 = ssub.s32 128, 128
      %15 = vsyncadd [#allocation3], %s14
      %s17 = sshll.u32 [#allocation2], 4
      %s18 = int_to_ptr.vmem [resolvable:$true] %s17
      %20 = dma.hbm_to_vmem [thread:$0]  %s0, 128, %s18, [#allocation3]
    $region5: #{tpu_custom_call.1} parent=1 // pred_fallthru
      _
    // Predicated region
    $region6: #{tpu_custom_call.1} parent=1 // pred_check
      _
    $region7: #{tpu_custom_call.1} parent=1 // pred_check_branch
      %22 = sbr.rel (0) target = $region9
    $region8: #{tpu_custom_call.1} parent=1 // pred_region
      %s24 = ssub.s32 1536, 1536
      %25 = vsyncadd [#allocation6], %s24
      %s26 = sshll.u32 [#allocation5], 4
      %s27 = int_to_ptr.vmem [resolvable:$true] %s26
      %32 = dma.hbm_to_vmem [thread:$0]  %s1, 1536, %s27, [#allocation6], 384, 384, 24
    $region9: #{tpu_custom_call.1} parent=1 // pred_fallthru
      _
    // Predicated region
    $region10: #{tpu_custom_call.1} parent=1 // pred_check
      _
    $region11: #{tpu_custom_call.1} parent=1 // pred_check_branch
      %34 = sbr.rel (0) target = $region13
    $region12: #{tpu_custom_call.1} parent=1 // pred_region
      _
    $region13: #{tpu_custom_call.1} parent=1 // pred_fallthru
      _
    // Predicated region
    $region14: #{tpu_custom_call.1} parent=1 // pred_check
      _
    $region15: #{tpu_custom_call.1} parent=1 // pred_check_branch
      %36 = sbr.rel (0) target = $region17
    $region16: #{tpu_custom_call.1} parent=1 // pred_region
      %37 = dma.done [#allocation3], 128
    $region17: #{tpu_custom_call.1} parent=1 // pred_fallthru
      _
    // Predicated region
    $region18: #{tpu_custom_call.1} parent=1 // pred_check
      _
    $region19: #{tpu_custom_call.1} parent=1 // pred_check_branch
      %39 = sbr.rel (0) target = $region21
    $region20: #{tpu_custom_call.1} parent=1 // pred_region
      %40 = dma.done [#allocation6], 1536
    $region21: #{tpu_custom_call.1} parent=1 // pred_fallthru
      _
    %v41 = vld [vmem:[#allocation2] sm:$0xff]
    %v42 = vld [vmem:[#allocation5] sm:$0xff]
    %v43 = vld [vmem:[#allocation5 + $0x8] sm:$0xff]
    %v44 = vld [vmem:[#allocation5 + $0x10] sm:$0xff]
    %v45 = vld [vmem:[#allocation5 + $0x18] sm:$0xff]
    %v46 = vld [vmem:[#allocation5 + $0x20] sm:$0xff]
    %v47 = vld [vmem:[#allocation5 + $0x28] sm:$0xff]
    %v48 = vld [vmem:[#allocation5 + $0x30] sm:$0xff]
    %v49 = vld [vmem:[#allocation5 + $0x38] sm:$0xff]
    %v50 = vld [vmem:[#allocation5 + $0x40] sm:$0xff]
    %v51 = vld [vmem:[#allocation5 + $0x48] sm:$0xff]
    %v52 = vld [vmem:[#allocation5 + $0x50] sm:$0xff]
    %v53 = vld [vmem:[#allocation5 + $0x58] sm:$0xff]
    %v54 = vld [vmem:[%s2] sm:$0x7]
    %v56 = vlaneseq
    %v57 = vshrl.u32 %v56, 7
    %v58 = vsub.s32 0, %v57
    %v59 = vrot.slane %v54, %v58
    %v60 = vlaneseq
    %v61 = vshrl.u32 %v60, 7
    %v62 = vsub.s32 1, %v61
    %v63 = vrot.slane %v54, %v62
    %v64 = vlaneseq
    %v65 = vshrl.u32 %v64, 7
    %v66 = vsub.s32 2, %v65
    %v67 = vrot.slane %v54, %v66
    %vm71 = vcmask 261120
    %v73 = vsel %vm71, %v41, 0
    %75 = vmatprep.subr.mxu0 0.0
    %76 = vmatpush1.msra.mxu0 0.0
    %77 = vmatprep.subr.mxu0 0.0
    %78 = vmatpush1.msra.mxu0 0.0
    %79 = vmatprep.subr.mxu0 0.0
    %80 = vmatpush1.msra.mxu0 0.0
    %81 = vmatprep.subr.mxu0 0.0
    %82 = vmatpush1.msra.mxu0 0.0
    %83 = vmatprep.subr.mxu0 0.0
    %84 = vmatpush1.msra.mxu0 0.0
    %85 = vmatprep.subr.mxu0 0.0
    %86 = vmatpush1.msra.mxu0 0.0
    %87 = vmatprep.subr.mxu0 0.0
    %88 = vmatpush1.msra.mxu0 0.0
    %89 = vmatprep.subr.mxu0 0.0
    %90 = vmatpush1.msra.mxu0 0.0
    %91 = vmatprep.subr.mxu0 0.0
    %92 = vmatpush1.msra.mxu0 0.0
    %93 = vmatprep.subr.mxu0 0.0
    %94 = vmatpush1.msra.mxu0 0.0
    %95 = vmatprep.subr.mxu0 0.0
    %96 = vmatpush1.msra.mxu0 0.0
    %97 = vmatprep.subr.mxu0 0.0
    %98 = vmatpush1.msra.mxu0 0.0
    %99 = vmatprep.subr.mxu0 %v52
    %100 = vmatpush1.msra.mxu0 %v51
    %101 = vmatprep.subr.mxu0 %v49
    %102 = vmatpush1.msra.mxu0 %v48
    %103 = vmatprep.subr.mxu0 %v46
    %104 = vmatpush1.msra.mxu0 %v45
    %105 = vmatprep.subr.mxu0 %v43
    %106 = vmatpush1.msra.mxu0 %v42
    %107 = vmatprep.subr.mxu0 0.0
    %108 = vmatpush2.msra.mxu0 0.0
    %109 = vmatprep.subr.mxu0 0.0
    %110 = vmatpush2.msra.mxu0 0.0
    %111 = vmatprep.subr.mxu0 0.0
    %112 = vmatpush2.msra.mxu0 0.0
    %113 = vmatprep.subr.mxu0 0.0
    %114 = vmatpush2.msra.mxu0 0.0
    %115 = vmatprep.subr.mxu0 0.0
    %116 = vmatpush2.msra.mxu0 0.0
    %117 = vmatprep.subr.mxu0 0.0
    %118 = vmatpush2.msra.mxu0 0.0
    %119 = vmatprep.subr.mxu0 0.0
    %120 = vmatpush2.msra.mxu0 0.0
    %121 = vmatprep.subr.mxu0 0.0
    %122 = vmatpush2.msra.mxu0 0.0
    %123 = vmatprep.subr.mxu0 0.0
    %124 = vmatpush2.msra.mxu0 0.0
    %125 = vmatprep.subr.mxu0 0.0
    %126 = vmatpush2.msra.mxu0 0.0
    %127 = vmatprep.subr.mxu0 0.0
    %128 = vmatpush2.msra.mxu0 0.0
    %129 = vmatprep.subr.mxu0 0.0
    %130 = vmatpush2.msra.mxu0 0.0
    %131 = vmatprep.subr.mxu0 0.0
    %132 = vmatpush2.msra.mxu0 0.0
    %133 = vmatprep.subr.mxu0 0.0
    %134 = vmatpush2.msra.mxu0 0.0
    %135 = vmatprep.subr.mxu0 0.0
    %136 = vmatpush2.msra.mxu0 0.0
    %137 = vmatprep.subr.mxu0 0.0
    %138 = vmatpush2.msra.mxu0 0.0
    %139 = vmatprep.mubr.f32.mxu0 0.0
    %140 = vmatmul.mubr.f32.gmra.mxu0 %v73
    %v141 = vpop.f32.mrf.mxu0
    %v142 = vadd.f32 %v59, %v141
    %v143 = vpop.f32.mrf.mxu0
    %v144 = vadd.f32 %v63, %v143
    %145 = vdwg.mxu0
    %146 = vmatprep.subr.mxu0 0.0
    %147 = vmatpush1.msra.mxu0 0.0
    %148 = vmatprep.subr.mxu0 0.0
    %149 = vmatpush1.msra.mxu0 0.0
    %150 = vmatprep.subr.mxu0 0.0
    %151 = vmatpush1.msra.mxu0 0.0
    %152 = vmatprep.subr.mxu0 0.0
    %153 = vmatpush1.msra.mxu0 0.0
    %154 = vmatprep.subr.mxu0 0.0
    %155 = vmatpush1.msra.mxu0 0.0
    %156 = vmatprep.subr.mxu0 0.0
    %157 = vmatpush1.msra.mxu0 0.0
    %158 = vmatprep.subr.mxu0 0.0
    %159 = vmatpush1.msra.mxu0 0.0
    %160 = vmatprep.subr.mxu0 0.0
    %161 = vmatpush1.msra.mxu0 0.0
    %162 = vmatprep.subr.mxu0 0.0
    %163 = vmatpush1.msra.mxu0 0.0
    %164 = vmatprep.subr.mxu0 0.0
    %165 = vmatpush1.msra.mxu0 0.0
    %166 = vmatprep.subr.mxu0 0.0
    %167 = vmatpush1.msra.mxu0 0.0
    %168 = vmatprep.subr.mxu0 0.0
    %169 = vmatpush1.msra.mxu0 0.0
    %170 = vmatprep.subr.mxu0 0.0
    %171 = vmatpush1.msra.mxu0 %v53
    %172 = vmatprep.subr.mxu0 0.0
    %173 = vmatpush1.msra.mxu0 %v50
    %174 = vmatprep.subr.mxu0 0.0
    %175 = vmatpush1.msra.mxu0 %v47
    %176 = vmatprep.subr.mxu0 0.0
    %177 = vmatpush1.msra.mxu0 %v44
    %178 = vmatprep.subr.mxu0 0.0
    %179 = vmatpush2.msra.mxu0 0.0
    %180 = vmatprep.subr.mxu0 0.0
    %181 = vmatpush2.msra.mxu0 0.0
    %182 = vmatprep.subr.mxu0 0.0
    %183 = vmatpush2.msra.mxu0 0.0
    %184 = vmatprep.subr.mxu0 0.0
    %185 = vmatpush2.msra.mxu0 0.0
    %186 = vmatprep.subr.mxu0 0.0
    %187 = vmatpush2.msra.mxu0 0.0
    %188 = vmatprep.subr.mxu0 0.0
    %189 = vmatpush2.msra.mxu0 0.0
    %190 = vmatprep.subr.mxu0 0.0
    %191 = vmatpush2.msra.mxu0 0.0
    %192 = vmatprep.subr.mxu0 0.0
    %193 = vmatpush2.msra.mxu0 0.0
    %194 = vmatprep.subr.mxu0 0.0
    %195 = vmatpush2.msra.mxu0 0.0
    %196 = vmatprep.subr.mxu0 0.0
    %197 = vmatpush2.msra.mxu0 0.0
    %198 = vmatprep.subr.mxu0 0.0
    %199 = vmatpush2.msra.mxu0 0.0
    %200 = vmatprep.subr.mxu0 0.0
    %201 = vmatpush2.msra.mxu0 0.0
    %202 = vmatprep.subr.mxu0 0.0
    %203 = vmatpush2.msra.mxu0 0.0
    %204 = vmatprep.subr.mxu0 0.0
    %205 = vmatpush2.msra.mxu0 0.0
    %206 = vmatprep.subr.mxu0 0.0
    %207 = vmatpush2.msra.mxu0 0.0
    %208 = vmatprep.subr.mxu0 0.0
    %209 = vmatpush2.msra.mxu0 0.0
    %210 = vmatprep.mubr.f32.mxu0 0.0
    %211 = vmatmul.mubr.f32.gmra.mxu0 %v73
    %v212 = vpop.f32.mrf.mxu0
    %v213 = vadd.f32 %v67, %v212
    %v214 = vpop.f32.mrf.mxu0
    %215 = vdwg.mxu0
    %216 = vmax.xlane.f32.xlu0 %v142
    %v217 = vpop.xlane.xlu0 %216
    %v218 = vsub.f32 %v142, %v217
    %v219 = vmul.f32 %v218, 1.442695
    %v220 = vpow.pop %v219
    %221 = vadd.xlane.f32.xlu0 %v220
    %v222 = vpop.xlane.xlu0 %221
    %v223 = vlog2.pop %v222
    %v224 = vmul.f32 %v223, 0.6931472
    %v225 = vsub.f32 %v218, %v224
    %226 = vmax.xlane.f32.xlu0 %v144
    %v227 = vpop.xlane.xlu0 %226
    %v228 = vsub.f32 %v144, %v227
    %v229 = vmul.f32 %v228, 1.442695
    %v230 = vpow.pop %v229
    %231 = vadd.xlane.f32.xlu0 %v230
    %v232 = vpop.xlane.xlu0 %231
    %v233 = vlog2.pop %v232
    %v234 = vmul.f32 %v233, 0.6931472
    %v235 = vsub.f32 %v228, %v234
    %236 = vmax.xlane.f32.xlu0 %v213
    %v237 = vpop.xlane.xlu0 %236
    %v238 = vsub.f32 %v213, %v237
    %v239 = vmul.f32 %v238, 1.442695
    %v240 = vpow.pop %v239
    %241 = vadd.xlane.f32.xlu0 %v240
    %v242 = vpop.xlane.xlu0 %241
    %v243 = vlog2.pop %v242
    %v244 = vmul.f32 %v243, 0.6931472
    %v245 = vsub.f32 %v238, %v244
    %v246 = vmax.f32 %v225, %v235
    %v247 = vmax.f32 %v246, %v245
    %v248 = vsub.f32 %v225, %v247
    %v249 = vmul.f32 %v248, 1.442695
    %v250 = vpow.pop %v249
    %v251 = vadd.f32 %v250, 0.0
    %v252 = vsub.f32 %v235, %v247
    %v253 = vmul.f32 %v252, 1.442695
    %v254 = vpow.pop %v253
    %v255 = vadd.f32 %v251, %v254
    %v256 = vsub.f32 %v245, %v247
    %v257 = vmul.f32 %v256, 1.442695
    %v258 = vpow.pop %v257
    %v259 = vadd.f32 %v255, %v258
    %v260 = vlog2.pop %v259
    %v261 = vmul.f32 %v260, 0.6931472
    %v262 = vadd.f32 %v247, %v261
    %v263 = vsub.f32 %v262, 1.0986123
    %v264 = vmax.f32 %v263, -92.1034
    %265 = vst [vmem:[#allocation7] sm:$0xff] %v264
    // Predicated region
    $region22: #{tpu_custom_call.1} parent=1 // pred_check
      _
    $region23: #{tpu_custom_call.1} parent=1 // pred_check_branch
      %267 = sbr.rel (0) target = $region25
    $region24: #{tpu_custom_call.1} parent=1 // pred_region
      %s269 = ssub.s32 128, 128
      %270 = vsyncadd [#allocation4], %s269
      %s272 = sshll.u32 [#allocation7], 4
      %s273 = int_to_ptr.vmem [resolvable:$true] %s272
      %275 = dma.vmem_to_hbm [thread:$0]  %s273, 128, %s3, [#allocation4]
    $region25: #{tpu_custom_call.1} parent=1 // pred_fallthru
      _
    // Predicated region
    $region26: #{tpu_custom_call.1} parent=1 // pred_check
      _
    $region27: #{tpu_custom_call.1} parent=1 // pred_check_branch
      %277 = sbr.rel (0) target = $region29
    $region28: #{tpu_custom_call.1} parent=1 // pred_region
      %278 = dma.done [#allocation4], 128
    $region29: #{tpu_custom_call.1} parent=1 // pred_fallthru
      _
    %279 = vsyncpa [#allocation3], 1
    %280 = vsyncpa [#allocation6], 1
    %281 = vsyncpa [#allocation4], 1

// kernel: tpu_custom_call.1
$region0: #{tpu_custom_call.1}
  #allocation0 [shape = 'u32[]', space=smem, size = 0x4, offset = 0x4, fixed_abs, tag = 'smem constant byte address 0x4 - core index']
  #allocation1 [shape = 'u32[144,128]{1,0:T(1,128)}', space=vmem, size = 0x12000, scoped, tag = 'internal scratch']
  %s0 = inlined_call_operand.hbm [shape: f32[8,32], index: 0, kind: input, shape index: {}]
  %s1 = inlined_call_operand.hbm [shape: f32[32,384], index: 1, kind: input, shape index: {}]
  %s2 = inlined_call_operand.vmem [shape: f32[1,384], index: 2, kind: input, shape index: {}]
  %s3 = inlined_call_operand.hbm [shape: f32[8,128], index: 3, kind: output, shape index: {}]
  %s4 = sld [smem:[#allocation0]]
  $region30: #{tpu_custom_call.1} parent=0
    _
  %s6 = ssub.s32 1, %s4
  %s7 = scalar_select 0, %s6, %s4
  $region1: #{tpu_custom_call.1} parent=0
    #allocation2 [shape = 'u8[4096]{0}', space=vmem, size = 0x1000, scoped, tag = 'input window, operand 0, single buffered']
    #allocation3 [shape = 's32[1]{0}', space=sflag, size = 0x4, scoped, tag = 'scoped memory for tpu_custom_call.1']
    #allocation4 [shape = 's32[1]{0}', space=sflag, size = 0x4, scoped, tag = 'scoped memory for tpu_custom_call.1']
    #allocation5 [shape = 'u8[49152]{0}', space=vmem, size = 0xc000, scoped, tag = 'input window, operand 1, single buffered']
    #allocation6 [shape = 's32[1]{0}', space=sflag, size = 0x4, scoped, tag = 'scoped memory for tpu_custom_call.1']
    #allocation7 [shape = 'u8[4096]{0}', space=vmem, size = 0x1000, scoped, tag = 'output window, operand 0, single buffered']
    %8 = vsyncpa [#allocation3], 0
    %9 = vsyncpa [#allocation6], 0
    %10 = vsyncpa [#allocation4], 0
    // Predicated region
    $region2: #{tpu_custom_call.1} parent=1 // pred_check
      _
    $region3: #{tpu_custom_call.1} parent=1 // pred_check_branch
      %12 = sbr.rel (0) target = $region5
    $region4: #{tpu_custom_call.1} parent=1 // pred_region
      %s14 = ssub.s32 128, 128
      %15 = vsyncadd [#allocation3], %s14
      %s17 = sshll.u32 [#allocation2], 4
      %s18 = int_to_ptr.vmem [resolvable:$true] %s17
      %20 = dma.hbm_to_vmem [thread:$0]  %s0, 128, %s18, [#allocation3]
    $region5: #{tpu_custom_call.1} parent=1 // pred_fallthru
      _
    // Predicated region
    $region6: #{tpu_custom_call.1} parent=1 // pred_check
      _
    $region7: #{tpu_custom_call.1} parent=1 // pred_check_branch
      %22 = sbr.rel (0) target = $region9
    $region8: #{tpu_custom_call.1} parent=1 // pred_region
      %s24 = ssub.s32 1536, 1536
      %25 = vsyncadd [#allocation6], %s24
      %s26 = sshll.u32 [#allocation5], 4
      %s27 = int_to_ptr.vmem [resolvable:$true] %s26
      %32 = dma.hbm_to_vmem [thread:$0]  %s1, 1536, %s27, [#allocation6], 384, 384, 24
    $region9: #{tpu_custom_call.1} parent=1 // pred_fallthru
      _
    // Predicated region
    $region10: #{tpu_custom_call.1} parent=1 // pred_check
      _
    $region11: #{tpu_custom_call.1} parent=1 // pred_check_branch
      %34 = sbr.rel (0) target = $region13
    $region12: #{tpu_custom_call.1} parent=1 // pred_region
      _
    $region13: #{tpu_custom_call.1} parent=1 // pred_fallthru
      _
    // Predicated region
    $region14: #{tpu_custom_call.1} parent=1 // pred_check
      _
    $region15: #{tpu_custom_call.1} parent=1 // pred_check_branch
      %36 = sbr.rel (0) target = $region17
    $region16: #{tpu_custom_call.1} parent=1 // pred_region
      %37 = dma.done [#allocation3], 128
    $region17: #{tpu_custom_call.1} parent=1 // pred_fallthru
      _
    // Predicated region
    $region18: #{tpu_custom_call.1} parent=1 // pred_check
      _
    $region19: #{tpu_custom_call.1} parent=1 // pred_check_branch
      %39 = sbr.rel (0) target = $region21
    $region20: #{tpu_custom_call.1} parent=1 // pred_region
      %40 = dma.done [#allocation6], 1536
    $region21: #{tpu_custom_call.1} parent=1 // pred_fallthru
      _
    %v41 = vld [vmem:[#allocation2] sm:$0xff]
    %v42 = vld [vmem:[#allocation5] sm:$0xff]
    %v43 = vld [vmem:[#allocation5 + $0x8] sm:$0xff]
    %v44 = vld [vmem:[#allocation5 + $0x10] sm:$0xff]
    %v45 = vld [vmem:[#allocation5 + $0x18] sm:$0xff]
    %v46 = vld [vmem:[#allocation5 + $0x20] sm:$0xff]
    %v47 = vld [vmem:[#allocation5 + $0x28] sm:$0xff]
    %v48 = vld [vmem:[#allocation5 + $0x30] sm:$0xff]
    %v49 = vld [vmem:[#allocation5 + $0x38] sm:$0xff]
    %v50 = vld [vmem:[#allocation5 + $0x40] sm:$0xff]
    %v51 = vld [vmem:[#allocation5 + $0x48] sm:$0xff]
    %v52 = vld [vmem:[#allocation5 + $0x50] sm:$0xff]
    %v53 = vld [vmem:[#allocation5 + $0x58] sm:$0xff]
    %v54 = vld [vmem:[%s2] sm:$0x7]
    %v56 = vlaneseq
    %v57 = vshrl.u32 %v56, 7
    %v58 = vsub.s32 0, %v57
    %v59 = vrot.slane %v54, %v58
    %v60 = vlaneseq
    %v61 = vshrl.u32 %v60, 7
    %v62 = vsub.s32 1, %v61
    %v63 = vrot.slane %v54, %v62
    %v64 = vlaneseq
    %v65 = vshrl.u32 %v64, 7
    %v66 = vsub.s32 2, %v65
    %v67 = vrot.slane %v54, %v66
    %vm71 = vcmask 261120
    %v73 = vsel %vm71, %v41, 0
    %75 = vmatprep.subr.mxu0 0.0
    %76 = vmatpush1.msra.mxu0 0.0
    %77 = vmatprep.subr.mxu0 0.0
    %78 = vmatpush1.msra.mxu0 0.0
    %79 = vmatprep.subr.mxu0 0.0
    %80 = vmatpush1.msra.mxu0 0.0
    %81 = vmatprep.subr.mxu0 0.0
    %82 = vmatpush1.msra.mxu0 0.0
    %83 = vmatprep.subr.mxu0 0.0
    %84 = vmatpush1.msra.mxu0 0.0
    %85 = vmatprep.subr.mxu0 0.0
    %86 = vmatpush1.msra.mxu0 0.0
    %87 = vmatprep.subr.mxu0 0.0
    %88 = vmatpush1.msra.mxu0 0.0
    %89 = vmatprep.subr.mxu0 0.0
    %90 = vmatpush1.msra.mxu0 0.0
    %91 = vmatprep.subr.mxu0 0.0
    %92 = vmatpush1.msra.mxu0 0.0
    %93 = vmatprep.subr.mxu0 0.0
    %94 = vmatpush1.msra.mxu0 0.0
    %95 = vmatprep.subr.mxu0 0.0
    %96 = vmatpush1.msra.mxu0 0.0
    %97 = vmatprep.subr.mxu0 0.0
    %98 = vmatpush1.msra.mxu0 0.0
    %99 = vmatprep.subr.mxu0 %v52
    %100 = vmatpush1.msra.mxu0 %v51
    %101 = vmatprep.subr.mxu0 %v49
    %102 = vmatpush1.msra.mxu0 %v48
    %103 = vmatprep.subr.mxu0 %v46
    %104 = vmatpush1.msra.mxu0 %v45
    %105 = vmatprep.subr.mxu0 %v43
    %106 = vmatpush1.msra.mxu0 %v42
    %107 = vmatprep.subr.mxu0 0.0
    %108 = vmatpush2.msra.mxu0 0.0
    %109 = vmatprep.subr.mxu0 0.0
    %110 = vmatpush2.msra.mxu0 0.0
    %111 = vmatprep.subr.mxu0 0.0
    %112 = vmatpush2.msra.mxu0 0.0
    %113 = vmatprep.subr.mxu0 0.0
    %114 = vmatpush2.msra.mxu0 0.0
    %115 = vmatprep.subr.mxu0 0.0
    %116 = vmatpush2.msra.mxu0 0.0
    %117 = vmatprep.subr.mxu0 0.0
    %118 = vmatpush2.msra.mxu0 0.0
    %119 = vmatprep.subr.mxu0 0.0
    %120 = vmatpush2.msra.mxu0 0.0
    %121 = vmatprep.subr.mxu0 0.0
    %122 = vmatpush2.msra.mxu0 0.0
    %123 = vmatprep.subr.mxu0 0.0
    %124 = vmatpush2.msra.mxu0 0.0
    %125 = vmatprep.subr.mxu0 0.0
    %126 = vmatpush2.msra.mxu0 0.0
    %127 = vmatprep.subr.mxu0 0.0
    %128 = vmatpush2.msra.mxu0 0.0
    %129 = vmatprep.subr.mxu0 0.0
    %130 = vmatpush2.msra.mxu0 0.0
    %131 = vmatprep.subr.mxu0 0.0
    %132 = vmatpush2.msra.mxu0 0.0
    %133 = vmatprep.subr.mxu0 0.0
    %134 = vmatpush2.msra.mxu0 0.0
    %135 = vmatprep.subr.mxu0 0.0
    %136 = vmatpush2.msra.mxu0 0.0
    %137 = vmatprep.subr.mxu0 0.0
    %138 = vmatpush2.msra.mxu0 0.0
    %139 = vmatprep.mubr.f32.mxu0 0.0
    %140 = vmatmul.mubr.f32.gmra.mxu0 %v73
    %v141 = vpop.f32.mrf.mxu0
    %v142 = vadd.f32 %v59, %v141
    %v143 = vpop.f32.mrf.mxu0
    %v144 = vadd.f32 %v63, %v143
    %145 = vdwg.mxu0
    %146 = vmatprep.subr.mxu0 0.0
    %147 = vmatpush1.msra.mxu0 0.0
    %148 = vmatprep.subr.mxu0 0.0
    %149 = vmatpush1.msra.mxu0 0.0
    %150 = vmatprep.subr.mxu0 0.0
    %151 = vmatpush1.msra.mxu0 0.0
    %152 = vmatprep.subr.mxu0 0.0
    %153 = vmatpush1.msra.mxu0 0.0
    %154 = vmatprep.subr.mxu0 0.0
    %155 = vmatpush1.msra.mxu0 0.0
    %156 = vmatprep.subr.mxu0 0.0
    %157 = vmatpush1.msra.mxu0 0.0
    %158 = vmatprep.subr.mxu0 0.0
    %159 = vmatpush1.msra.mxu0 0.0
    %160 = vmatprep.subr.mxu0 0.0
    %161 = vmatpush1.msra.mxu0 0.0
    %162 = vmatprep.subr.mxu0 0.0
    %163 = vmatpush1.msra.mxu0 0.0
    %164 = vmatprep.subr.mxu0 0.0
    %165 = vmatpush1.msra.mxu0 0.0
    %166 = vmatprep.subr.mxu0 0.0
    %167 = vmatpush1.msra.mxu0 0.0
    %168 = vmatprep.subr.mxu0 0.0
    %169 = vmatpush1.msra.mxu0 0.0
    %170 = vmatprep.subr.mxu0 0.0
    %171 = vmatpush1.msra.mxu0 %v53
    %172 = vmatprep.subr.mxu0 0.0
    %173 = vmatpush1.msra.mxu0 %v50
    %174 = vmatprep.subr.mxu0 0.0
    %175 = vmatpush1.msra.mxu0 %v47
    %176 = vmatprep.subr.mxu0 0.0
    %177 = vmatpush1.msra.mxu0 %v44
    %178 = vmatprep.subr.mxu0 0.0
    %179 = vmatpush2.msra.mxu0 0.0
    %180 = vmatprep.subr.mxu0 0.0
    %181 = vmatpush2.msra.mxu0 0.0
    %182 = vmatprep.subr.mxu0 0.0
    %183 = vmatpush2.msra.mxu0 0.0
    %184 = vmatprep.subr.mxu0 0.0
    %185 = vmatpush2.msra.mxu0 0.0
    %186 = vmatprep.subr.mxu0 0.0
    %187 = vmatpush2.msra.mxu0 0.0
    %188 = vmatprep.subr.mxu0 0.0
    %189 = vmatpush2.msra.mxu0 0.0
    %190 = vmatprep.subr.mxu0 0.0
    %191 = vmatpush2.msra.mxu0 0.0
    %192 = vmatprep.subr.mxu0 0.0
    %193 = vmatpush2.msra.mxu0 0.0
    %194 = vmatprep.subr.mxu0 0.0
    %195 = vmatpush2.msra.mxu0 0.0
    %196 = vmatprep.subr.mxu0 0.0
    %197 = vmatpush2.msra.mxu0 0.0
    %198 = vmatprep.subr.mxu0 0.0
    %199 = vmatpush2.msra.mxu0 0.0
    %200 = vmatprep.subr.mxu0 0.0
    %201 = vmatpush2.msra.mxu0 0.0
    %202 = vmatprep.subr.mxu0 0.0
    %203 = vmatpush2.msra.mxu0 0.0
    %204 = vmatprep.subr.mxu0 0.0
    %205 = vmatpush2.msra.mxu0 0.0
    %206 = vmatprep.subr.mxu0 0.0
    %207 = vmatpush2.msra.mxu0 0.0
    %208 = vmatprep.subr.mxu0 0.0
    %209 = vmatpush2.msra.mxu0 0.0
    %210 = vmatprep.mubr.f32.mxu0 0.0
    %211 = vmatmul.mubr.f32.gmra.mxu0 %v73
    %v212 = vpop.f32.mrf.mxu0
    %v213 = vadd.f32 %v67, %v212
    %v214 = vpop.f32.mrf.mxu0
    %215 = vdwg.mxu0
    %216 = vmax.xlane.f32.xlu0 %v142
    %v217 = vpop.xlane.xlu0 %216
    %v218 = vsub.f32 %v142, %v217
    %v219 = vmul.f32 %v218, 1.442695
    %v220 = vpow.pop %v219
    %221 = vadd.xlane.f32.xlu0 %v220
    %v222 = vpop.xlane.xlu0 %221
    %v223 = vlog2.pop %v222
    %v224 = vmul.f32 %v223, 0.6931472
    %v225 = vsub.f32 %v218, %v224
    %226 = vmax.xlane.f32.xlu0 %v144
    %v227 = vpop.xlane.xlu0 %226
    %v228 = vsub.f32 %v144, %v227
    %v229 = vmul.f32 %v228, 1.442695
    %v230 = vpow.pop %v229
    %231 = vadd.xlane.f32.xlu0 %v230
    %v232 = vpop.xlane.xlu0 %231
    %v233 = vlog2.pop %v232
    %v234 = vmul.f32 %v233, 0.6931472
    %v235 = vsub.f32 %v228, %v234
    %236 = vmax.xlane.f32.xlu0 %v213
    %v237 = vpop.xlane.xlu0 %236
    %v238 = vsub.f32 %v213, %v237
    %v239 = vmul.f32 %v238, 1.442695
    %v240 = vpow.pop %v239
    %241 = vadd.xlane.f32.xlu0 %v240
    %v242 = vpop.xlane.xlu0 %241
    %v243 = vlog2.pop %v242
    %v244 = vmul.f32 %v243, 0.6931472
    %v245 = vsub.f32 %v238, %v244
    %v246 = vmax.f32 %v225, %v235
    %v247 = vmax.f32 %v246, %v245
    %v248 = vsub.f32 %v225, %v247
    %v249 = vmul.f32 %v248, 1.442695
    %v250 = vpow.pop %v249
    %v251 = vadd.f32 %v250, 0.0
    %v252 = vsub.f32 %v235, %v247
    %v253 = vmul.f32 %v252, 1.442695
    %v254 = vpow.pop %v253
    %v255 = vadd.f32 %v251, %v254
    %v256 = vsub.f32 %v245, %v247
    %v257 = vmul.f32 %v256, 1.442695
    %v258 = vpow.pop %v257
    %v259 = vadd.f32 %v255, %v258
    %v260 = vlog2.pop %v259
    %v261 = vmul.f32 %v260, 0.6931472
    %v262 = vadd.f32 %v247, %v261
    %v263 = vsub.f32 %v262, 1.0986123
    %v264 = vmax.f32 %v263, -92.1034
    %265 = vst [vmem:[#allocation7] sm:$0xff] %v264
    // Predicated region
    $region22: #{tpu_custom_call.1} parent=1 // pred_check
      _
    $region23: #{tpu_custom_call.1} parent=1 // pred_check_branch
      %267 = sbr.rel (0) target = $region25
    $region24: #{tpu_custom_call.1} parent=1 // pred_region
      %s269 = ssub.s32 128, 128
      %270 = vsyncadd [#allocation4], %s269
      %s272 = sshll.u32 [#allocation7], 4
      %s273 = int_to_ptr.vmem [resolvable:$true] %s272
      %275 = dma.vmem_to_hbm [thread:$0]  %s273, 128, %s3, [#allocation4]
    $region25: #{tpu_custom_call.1} parent=1 // pred_fallthru
      _
    // Predicated region
    $region26: #{tpu_custom_call.1} parent=1 // pred_check
      _
    $region27: #{tpu_custom_call.1} parent=1 // pred_check_branch
      %277 = sbr.rel (0) target = $region29
    $region28: #{tpu_custom_call.1} parent=1 // pred_region
      %278 = dma.done [#allocation4], 128
    $region29: #{tpu_custom_call.1} parent=1 // pred_fallthru
      _
    %279 = vsyncpa [#allocation3], 1
    %280 = vsyncpa [#allocation6], 1
    %281 = vsyncpa [#allocation4], 1

</llo_original>
